<compile_context>
chip_gen: v5e
topology: v5e:2x2
jax: 0.10.0
libtpu: 0.0.40
codegen_flags: <defaults>
</compile_context>

<pallas_src>
import numpy as np

import jax
import jax.numpy as jnp
from jax import lax
from jax.experimental import pallas as pl
from jax.experimental.pallas import tpu as pltpu


# ----------------------------------------------------------------------------
# Kernel
# ----------------------------------------------------------------------------
def _build_kernel(cp, k, cod, r_cb, r_kwa, r_kwb, r_fcb, r_m):
    """Returns a kernel closed over the static slab layout offsets.

    x_ref    : (K, C*P)      flattened input
    slab_ref : (rows, 128)   packed static params (see prepare_cnn_params)
    out_ref  : (1, C*out)    flattened (c, j) output
    """

    def kernel(x_ref, slab_ref, out_ref):
        x = x_ref[...]                                     # (K, CP)   f32

        wc = slab_ref[0:cp, 0:cp]                          # (CP, CP)  dense conv
        cb = slab_ref[r_cb:r_cb + 1, 0:cp]                 # (1, CP)   conv bias
        kwa = slab_ref[r_kwa:r_kwa + 1, 0:k]               # (1, K)    dt*kweights
        kwb = slab_ref[r_kwb:r_kwb + 1, 0:k]               # (1, K)    kweights
        fcb = slab_ref[r_fcb:r_fcb + 1, 0:cod]             # (1, C*out) fc bias
        m = slab_ref[r_m:r_m + cp, 0:cod]                  # (CP, C*out) fused fc

        # Conv3d as dense matmul + bias + tanh.             MXU + VPU + EUP.
        x1 = jnp.tanh(jnp.dot(x, wc, preferred_element_type=jnp.float32) + cb)

        # kweights residual combine + k-reduction on the MXU (no XLU hop):
        #   y = (dt*kw)^T @ x1 + kw^T @ x                   -> (1, CP)
        y = (jnp.dot(kwa, x1, preferred_element_type=jnp.float32)
             + jnp.dot(kwb, x, preferred_element_type=jnp.float32))

        # Fused (kweights-sum ∘ Linear) matmul + fc bias.    MXU + VPU.
        out_ref[...] = jnp.dot(y, m, preferred_element_type=jnp.float32) + fcb

    return kernel


# ----------------------------------------------------------------------------
# Parameter-only preprocessing (reusable across forward calls)
# ----------------------------------------------------------------------------
def _conv_selector(KS, D, H, W, pad):
    """Static 0/1 tensor G[q, p_in, p_out]: input position p_in feeds output
    position p_out through kernel offset q = (kd*KS + kh)*KS + kw (zero pad)."""
    P = D * H * W
    G = np.zeros((KS ** 3, P, P), np.float32)
    for kd in range(KS):
        for kh in range(KS):
            for kw in range(KS):
                q = (kd * KS + kh) * KS + kw
                for d in range(D):
                    di = d + kd - pad
                    if not (0 <= di < D):
                        continue
                    for h in range(H):
                        hi = h + kh - pad
                        if not (0 <= hi < H):
                            continue
                        for w in range(W):
                            wi = w + kw - pad
                            if not (0 <= wi < W):
                                continue
                            G[q, (di * H + hi) * W + wi, (d * H + h) * W + w] = 1.0
    return G


def _rup(a, m):
    return -(-a // m) * m


def prepare_cnn_params(conv_w, conv_b, kweights, fc_w, fc_b, dt, spatial):
    """Packs every static parameter into one pre-padded f32 slab + layout."""
    D, H, W = spatial
    Cout, Cin, KS, _, _ = conv_w.shape
    assert Cin == Cout, "fused kernel assumes Cin == Cout (residual alignment)"
    pad = (KS - 1) // 2
    P = D * H * W
    CP = Cout * P
    out_dim = fc_w.shape[0]
    COD = Cout * out_dim
    K = kweights.shape[0]

    # Dense conv matrix: Wc[(c_in, p_in), (c_out, p_out)].
    G = jnp.asarray(_conv_selector(KS, D, H, W, pad))                   # (KS^3, P, P)
    wflat = conv_w.reshape(Cout, Cin, KS ** 3)
    Wc = jnp.einsum('oiq,qab->iaob', wflat, G).reshape(Cin * P, Cout * P)
    cb_row = jnp.repeat(conv_b, P)[None, :]                             # (1, CP)

    # dt folded into one kweights row; plain kweights in the other.
    kwa = (kweights[:, 0] * dt)[None, :]                                # (1, K)
    kwb = kweights[:, 0][None, :]                                       # (1, K)

    # Fused kweights-sum + Linear: M[(c, p), (c', j)] = (c == c') * fc_w[j, p].
    eye_c = jnp.eye(Cout, dtype=fc_w.dtype)
    M = (eye_c[:, None, :, None] * fc_w.T[None, :, None, :]
         ).reshape(CP, COD)                                             # (CP, C*out)
    fcb_flat = jnp.tile(fc_b, Cout)[None, :]                            # (1, C*out)

    # Slab layout: every piece starts at an 8-aligned row, column 0.
    r_cb = _rup(CP, 8)
    r_kwa = r_cb + 8
    r_kwb = r_kwa + 8
    r_fcb = r_kwb + 8
    r_m = r_fcb + 8
    rows = _rup(r_m + CP, 8)
    cols = _rup(max(CP, K, COD), 128)

    slab = jnp.zeros((rows, cols), jnp.float32)
    slab = slab.at[0:CP, 0:CP].set(Wc.astype(jnp.float32))
    slab = slab.at[r_cb:r_cb + 1, 0:CP].set(cb_row.astype(jnp.float32))
    slab = slab.at[r_kwa:r_kwa + 1, 0:K].set(kwa.astype(jnp.float32))
    slab = slab.at[r_kwb:r_kwb + 1, 0:K].set(kwb.astype(jnp.float32))
    slab = slab.at[r_fcb:r_fcb + 1, 0:COD].set(fcb_flat.astype(jnp.float32))
    slab = slab.at[r_m:r_m + CP, 0:COD].set(M.astype(jnp.float32))

    layout = dict(cp=CP, k=K, cod=COD, r_cb=r_cb, r_kwa=r_kwa,
                  r_kwb=r_kwb, r_fcb=r_fcb, r_m=r_m)
    return slab, layout


# ----------------------------------------------------------------------------
# Forward wrapper
# ----------------------------------------------------------------------------
def make_cnn_forward(layout, slab_shape, num_channels, output_dim):
    cp, k, cod = layout["cp"], layout["k"], layout["cod"]
    kernel = _build_kernel(**layout)

    cost = pl.CostEstimate(
        flops=int(2 * k * cp * cp + k * cp        # conv matmul + bias
                  + 4 * k * cp                    # two (1,K)@(K,CP) reductions
                  + 2 * cp * cod + cod),          # fc matmul + bias
        transcendentals=int(k * cp),              # tanh
        bytes_accessed=int(4 * (k * cp + slab_shape[0] * slab_shape[1] + cod)),
    )

    @jax.jit
    def forward(x, slab):
        """x: (k, C, D, H, W) float32.  Returns (C, output_dim) like PyTorch."""
        x_flat = x.reshape(x.shape[0], -1).astype(jnp.float32)          # (K, C*P)
        out_flat = pl.pallas_call(
            kernel,
            out_shape=jax.ShapeDtypeStruct((1, cod), jnp.float32),
            in_specs=[pl.BlockSpec(memory_space=pltpu.MemorySpace.VMEM),
                      pl.BlockSpec(memory_space=pltpu.MemorySpace.VMEM)],
            out_specs=pl.BlockSpec(memory_space=pltpu.MemorySpace.VMEM),
            cost_estimate=cost,
        )(x_flat, slab)
        return out_flat.reshape(num_channels, output_dim)

    return forward


# ----------------------------------------------------------------------------
# Pure-JAX reference mirroring the PyTorch forward
# ----------------------------------------------------------------------------
def ref_forward(x, conv_w, conv_b, kweights, fc_w, fc_b, dt):
    pad = (conv_w.shape[2] - 1) // 2
    x1 = lax.conv_general_dilated(
        x, conv_w, window_strides=(1, 1, 1),
        padding=((pad, pad),) * 3,
        dimension_numbers=('NCDHW', 'OIDHW', 'NCDHW'))
    x1 = jnp.tanh(x1 + conv_b.reshape(1, -1, 1, 1, 1))
    y = (kweights.reshape(x.shape[0], 1, 1, 1, 1) * (dt * x1 + x)).sum(axis=0)
    return y.reshape(x.shape[1], -1) @ fc_w.T + fc_b


if __name__ == "__main__":
    k, C, width = 5, 2, 3
    KS, out_dim = 5, 2
    dt = 0.01

    key = jax.random.PRNGKey(0)
    kx, kcw, kcb, kkw, kfw = jax.random.split(key, 5)

    # Deterministic synthetic parameters (shapes from the module's __init__).
    x = jax.random.normal(kx, (k, C, width, width, width), jnp.float32)
    conv_w = 0.05 * jax.random.normal(kcw, (C, C, KS, KS, KS), jnp.float32)
    conv_b = 0.05 * jax.random.normal(kcb, (C,), jnp.float32)
    kweights = jax.random.normal(kkw, (k, 1), jnp.float32) * (2.0 / (k + 1)) ** 0.5
    fc_w = jax.random.normal(kfw, (out_dim, width ** 3), jnp.float32) \
        * (2.0 / (width ** 3 + out_dim)) ** 0.5
    fc_b = jnp.zeros((out_dim,), jnp.float32)

    # Parameter-only prep (cacheable across calls); one kernel call per forward.
    slab, layout = prepare_cnn_params(conv_w, conv_b, kweights, fc_w, fc_b, dt,
                                      spatial=(width, width, width))
    slab = jax.block_until_ready(slab)
    cnn_forward = make_cnn_forward(layout, slab.shape, C, out_dim)

    out = cnn_forward(x, slab)
    out = jax.block_until_ready(out)

    ref = ref_forward(x, conv_w, conv_b, kweights, fc_w, fc_b, dt)
    assert out.shape == (C, out_dim)
    assert jnp.allclose(out, ref, atol=2e-3, rtol=2e-3), (out, ref)

    print("KERNEL_OK")
</pallas_src>

<mosaic_0001>
module attributes {stable_mosaic.version = 11 : i64} {
  func.func @kernel(%arg0: memref<5x54xf32, #tpu.memory_space<vmem>>, %arg1: memref<144x128xf32, #tpu.memory_space<vmem>>, %arg2: memref<1x4xf32, #tpu.memory_space<vmem>>) attributes {dimension_semantics = [], scalar_prefetch = 0 : i64, scratch_operands = 0 : i64, tpu.core_type = #tpu.core_type<tc>} {
    %c0 = arith.constant 0 : index
    %c0_0 = arith.constant 0 : index
    %0 = vector.load %arg0[%c0, %c0_0] : memref<5x54xf32, #tpu.memory_space<vmem>>, vector<5x54xf32>
    %c0_1 = arith.constant 0 : index
    %c0_2 = arith.constant 0 : index
    %1 = vector.load %arg1[%c0_1, %c0_2] : memref<144x128xf32, #tpu.memory_space<vmem>>, vector<54x54xf32>
    %c56 = arith.constant 56 : index
    %c0_3 = arith.constant 0 : index
    %2 = vector.load %arg1[%c56, %c0_3] : memref<144x128xf32, #tpu.memory_space<vmem>>, vector<1x54xf32>
    %c64 = arith.constant 64 : index
    %c0_4 = arith.constant 0 : index
    %3 = vector.load %arg1[%c64, %c0_4] : memref<144x128xf32, #tpu.memory_space<vmem>>, vector<1x5xf32>
    %c72 = arith.constant 72 : index
    %c0_5 = arith.constant 0 : index
    %4 = vector.load %arg1[%c72, %c0_5] : memref<144x128xf32, #tpu.memory_space<vmem>>, vector<1x5xf32>
    %c80 = arith.constant 80 : index
    %c0_6 = arith.constant 0 : index
    %5 = vector.load %arg1[%c80, %c0_6] : memref<144x128xf32, #tpu.memory_space<vmem>>, vector<1x4xf32>
    %c88 = arith.constant 88 : index
    %c0_7 = arith.constant 0 : index
    %6 = vector.load %arg1[%c88, %c0_7] : memref<144x128xf32, #tpu.memory_space<vmem>>, vector<54x4xf32>
    %cst = arith.constant dense<0.000000e+00> : vector<5x54xf32>
    %7 = tpu.matmul %0, %1, %cst {dimension_numbers = #tpu.dot_dimension_numbers<[1], [0], [0], [1], [0, 0, 1, 1], [], []>} : vector<5x54xf32>, vector<54x54xf32>, vector<5x54xf32> -> vector<5x54xf32>
    %8 = vector.broadcast %2 : vector<1x54xf32> to vector<5x54xf32>
    %9 = arith.addf %7, %8 : vector<5x54xf32>
    %10 = math.tanh %9 : vector<5x54xf32>
    %cst_8 = arith.constant dense<0.000000e+00> : vector<1x54xf32>
    %11 = tpu.matmul %3, %10, %cst_8 {dimension_numbers = #tpu.dot_dimension_numbers<[1], [0], [0], [1], [0, 0, 1, 1], [], []>} : vector<1x5xf32>, vector<5x54xf32>, vector<1x54xf32> -> vector<1x54xf32>
    %cst_9 = arith.constant dense<0.000000e+00> : vector<1x54xf32>
    %12 = tpu.matmul %4, %0, %cst_9 {dimension_numbers = #tpu.dot_dimension_numbers<[1], [0], [0], [1], [0, 0, 1, 1], [], []>} : vector<1x5xf32>, vector<5x54xf32>, vector<1x54xf32> -> vector<1x54xf32>
    %13 = arith.addf %11, %12 : vector<1x54xf32>
    %cst_10 = arith.constant dense<0.000000e+00> : vector<1x4xf32>
    %14 = tpu.matmul %13, %6, %cst_10 {dimension_numbers = #tpu.dot_dimension_numbers<[1], [0], [0], [1], [0, 0, 1, 1], [], []>} : vector<1x54xf32>, vector<54x4xf32>, vector<1x4xf32> -> vector<1x4xf32>
    %15 = arith.addf %14, %5 : vector<1x4xf32>
    %c0_11 = arith.constant 0 : index
    %c0_12 = arith.constant 0 : index
    %16 = vector.load %arg2[%c0_11, %c0_12] : memref<1x4xf32, #tpu.memory_space<vmem>>, vector<1x4xf32>
    tpu.vector_store %arg2[%c0_11, %c0_12], %15 {strides = array<i32>} : memref<1x4xf32, #tpu.memory_space<vmem>>, vector<1x4xf32>,
    return
  }
}

</mosaic_0001>

<llo_original>
// kernel: forward.1
$region0: #{forward.1}
  #allocation0 [shape = 'u32[]', space=smem, size = 0x4, offset = 0x4, fixed_abs, tag = 'smem constant byte address 0x4 - core index']
  #allocation1 [shape = 'u32[72,128]{1,0:T(1,128)}', space=vmem, size = 0x9000, scoped, tag = 'internal scratch']
  %s0 = inlined_call_operand.vmem [shape: f32[5,54], index: 0, kind: input, shape index: {}]
  %s1 = inlined_call_operand.vmem [shape: f32[144,128], index: 1, kind: input, shape index: {}]
  %s2 = inlined_call_operand.vmem [shape: f32[1,4], index: 2, kind: output, shape index: {}]
  %s3 = sld [smem:[#allocation0]]
  $region18: #{forward.1} parent=0
    _
  %s5 = ssub.s32 1, %s3
  %s6 = scalar_select 0, %s5, %s3
  // Predicated region
  $region2: #{forward.1} parent=0 // pred_check
    _
  $region3: #{forward.1} parent=0 // pred_check_branch
    %8 = sbr.rel (0) target = $region5
  $region4: #{forward.1} parent=0 // pred_region
    _
  $region5: #{forward.1} parent=0 // pred_fallthru
    _
  // Predicated region
  $region6: #{forward.1} parent=0 // pred_check
    _
  $region7: #{forward.1} parent=0 // pred_check_branch
    %10 = sbr.rel (0) target = $region9
  $region8: #{forward.1} parent=0 // pred_region
    _
  $region9: #{forward.1} parent=0 // pred_fallthru
    _
  %v11 = vld [vmem:[%s0] sm:$0x1f]
  %v12 = vld [vmem:[%s1] sm:$0xff]
  %v13 = vld [vmem:[%s1 + $0x8] sm:$0xff]
  %v14 = vld [vmem:[%s1 + $0x10] sm:$0xff]
  %v15 = vld [vmem:[%s1 + $0x18] sm:$0xff]
  %v16 = vld [vmem:[%s1 + $0x20] sm:$0xff]
  %v17 = vld [vmem:[%s1 + $0x28] sm:$0xff]
  %v18 = vld [vmem:[%s1 + $0x30] sm:$0x3f]
  %v19 = vld [vmem:[%s1 + $0x38] sm:$0x1]
  %v20 = vld [vmem:[%s1 + $0x40] sm:$0x1]
  %v21 = vld [vmem:[%s1 + $0x48] sm:$0x1]
  %v22 = vld [vmem:[%s1 + $0x50] sm:$0x1]
  %v23 = vld [vmem:[%s1 + $0x58] sm:$0xff]
  %v24 = vld [vmem:[%s1 + $0x60] sm:$0xff]
  %v25 = vld [vmem:[%s1 + $0x68] sm:$0xff]
  %v26 = vld [vmem:[%s1 + $0x70] sm:$0xff]
  %v27 = vld [vmem:[%s1 + $0x78] sm:$0xff]
  %v28 = vld [vmem:[%s1 + $0x80] sm:$0xff]
  %v29 = vld [vmem:[%s1 + $0x88] sm:$0x3f]
  %v30 = vperm.slane %v19, 0
  %vm31 = vcmask 441344
  %v33 = vsel %vm31, %v11, 0
  %vm35 = vcmask 1045504
  %v37 = vsel %vm35, %v18, 0
  %39 = vmatpush.msra.mxu0 0.0
  %40 = vmatpush.msra.mxu0 0.0
  %41 = vmatpush.msra.mxu0 0.0
  %42 = vmatpush.msra.mxu0 0.0
  %43 = vmatpush.msra.mxu0 0.0
  %44 = vmatpush.msra.mxu0 0.0
  %45 = vmatpush.msra.mxu0 0.0
  %46 = vmatpush.msra.mxu0 0.0
  %47 = vmatpush.msra.mxu0 0.0
  %48 = vmatpush.msra.mxu0 %v37
  %49 = vmatpush.msra.mxu0 %v17
  %50 = vmatpush.msra.mxu0 %v16
  %51 = vmatpush.msra.mxu0 %v15
  %52 = vmatpush.msra.mxu0 %v14
  %53 = vmatpush.msra.mxu0 %v13
  %54 = vmatpush.msra.mxu0 %v12
  %55 = vmatmul.f32.gmra.mxu0 %v33
  %v56 = vpop.f32.mrf.mxu0
  %v57 = vadd.f32 %v30, %v56
  %58 = vdwg.mxu0
  %v59 = vtanh.pop %v57
  %vm60 = vcmask 39936
  %v62 = vsel %vm60, %v21, 0
  %vm64 = vcmask 1044480
  %v65 = vsel %vm64, %v11, 0
  %67 = vmatpush.msra.mxu0 0.0
  %68 = vmatpush.msra.mxu0 0.0
  %69 = vmatpush.msra.mxu0 0.0
  %70 = vmatpush.msra.mxu0 0.0
  %71 = vmatpush.msra.mxu0 0.0
  %72 = vmatpush.msra.mxu0 0.0
  %73 = vmatpush.msra.mxu0 0.0
  %74 = vmatpush.msra.mxu0 0.0
  %75 = vmatpush.msra.mxu0 0.0
  %76 = vmatpush.msra.mxu0 0.0
  %77 = vmatpush.msra.mxu0 0.0
  %78 = vmatpush.msra.mxu0 0.0
  %79 = vmatpush.msra.mxu0 0.0
  %80 = vmatpush.msra.mxu0 0.0
  %81 = vmatpush.msra.mxu0 0.0
  %82 = vmatpush.msra.mxu0 %v65
  %83 = vmatmul.f32.gmra.mxu0 %v62
  %v84 = vpop.f32.mrf.mxu0
  %v85 = vadd.f32 0.0, %v84
  %86 = vdwg.mxu0
  %v88 = vsel %vm60, %v20, 0
  %v91 = vsel %vm64, %v59, 0
  %93 = vmatpush.msra.mxu0 0.0
  %94 = vmatpush.msra.mxu0 0.0
  %95 = vmatpush.msra.mxu0 0.0
  %96 = vmatpush.msra.mxu0 0.0
  %97 = vmatpush.msra.mxu0 0.0
  %98 = vmatpush.msra.mxu0 0.0
  %99 = vmatpush.msra.mxu0 0.0
  %100 = vmatpush.msra.mxu0 0.0
  %101 = vmatpush.msra.mxu0 0.0
  %102 = vmatpush.msra.mxu0 0.0
  %103 = vmatpush.msra.mxu0 0.0
  %104 = vmatpush.msra.mxu0 0.0
  %105 = vmatpush.msra.mxu0 0.0
  %106 = vmatpush.msra.mxu0 0.0
  %107 = vmatpush.msra.mxu0 0.0
  %108 = vmatpush.msra.mxu0 %v91
  %109 = vmatmul.f32.gmra.mxu0 %v88
  %v110 = vpop.f32.mrf.mxu0
  %v111 = vadd.f32 %v85, %v110
  %112 = vdwg.mxu0
  %v114 = vsel %vm31, %v111, 0
  %v117 = vsel %vm35, %v29, 0
  %119 = vmatpush.msra.mxu0 0.0
  %120 = vmatpush.msra.mxu0 0.0
  %121 = vmatpush.msra.mxu0 0.0
  %122 = vmatpush.msra.mxu0 0.0
  %123 = vmatpush.msra.mxu0 0.0
  %124 = vmatpush.msra.mxu0 0.0
  %125 = vmatpush.msra.mxu0 0.0
  %126 = vmatpush.msra.mxu0 0.0
  %127 = vmatpush.msra.mxu0 0.0
  %128 = vmatpush.msra.mxu0 %v117
  %129 = vmatpush.msra.mxu0 %v28
  %130 = vmatpush.msra.mxu0 %v27
  %131 = vmatpush.msra.mxu0 %v26
  %132 = vmatpush.msra.mxu0 %v25
  %133 = vmatpush.msra.mxu0 %v24
  %134 = vmatpush.msra.mxu0 %v23
  %135 = vmatmul.f32.gmra.mxu0 %v114
  %v136 = vpop.f32.mrf.mxu0
  %v137 = vadd.f32 %v22, %v136
  %138 = vdwg.mxu0
  %vm139 = vcmask 24576
  %140 = vst.msk [vmem:[%s2] sm:$0x1] %vm139, %v137
  // Predicated region
  $region10: #{forward.1} parent=0 // pred_check
    _
  $region11: #{forward.1} parent=0 // pred_check_branch
    %142 = sbr.rel (0) target = $region13
  $region12: #{forward.1} parent=0 // pred_region
    _
  $region13: #{forward.1} parent=0 // pred_fallthru
    _
  // Predicated region
  $region14: #{forward.1} parent=0 // pred_check
    _
  $region15: #{forward.1} parent=0 // pred_check_branch
    %144 = sbr.rel (0) target = $region17
  $region16: #{forward.1} parent=0 // pred_region
    _
  $region17: #{forward.1} parent=0 // pred_fallthru
    _

</llo_original>
